<compile_context>
chip_gen: v7x
topology: tpu7x:2x2x1
jax: 0.10.0
libtpu: 0.0.40
codegen_flags: <defaults>
</compile_context>

<pallas_src>
import functools

import jax
import jax.numpy as jnp
from jax import lax
from jax.experimental import pallas as pl
from jax.experimental.pallas import tpu as pltpu


def _kap_decision_kernel(x_ref, w_ref, b_ref, g_ref, o_ref, *,
                         num_kap, num_classes, temp, hard):
    # One fused linear layer for all kap heads:
    #   [bt, D] @ [D, num_kap*C] + [1, num_kap*C] -> [bt, num_kap*C]
    logits = jnp.dot(x_ref[...], w_ref[...],
                     preferred_element_type=jnp.float32) + b_ref[...]

    # Gumbel perturbation + temperature.
    y = (logits + g_ref[...]) * jnp.float32(1.0 / temp)

    # Per-head softmax over the class dim.  Statically unrolled over num_kap so
    # all slices/stores use static offsets (avoids in-kernel lane-dim reshape);
    # the final HBM writeback is still one lane-dense [bt, num_kap*C] block.
    for k in range(num_kap):
        lo = k * num_classes
        yk = y[:, lo:lo + num_classes]
        yk = yk - jnp.max(yk, axis=-1, keepdims=True)
        e = jnp.exp(yk)
        s = jnp.sum(e, axis=-1, keepdims=True)
        pk = e / s
        if hard:
            # Exact one-hot at the (first) argmax, like torch gumbel_softmax(hard=True).
            # TODO(synk): straight-through gradient of hard=True not reproduced
            # (forward-only kernel).
            iota = lax.broadcasted_iota(jnp.int32, pk.shape, 1)
            is_max = yk == jnp.max(yk, axis=-1, keepdims=True)
            first = jnp.min(jnp.where(is_max, iota, num_classes),
                            axis=-1, keepdims=True)
            pk = (iota == first).astype(pk.dtype)
        o_ref[:, lo:lo + num_classes] = pk.astype(o_ref.dtype)


def kap_decision_forward(x, w, b, key, *, temp=0.001, hard=False):
    """x: [B, D] f32; w: [num_kap, D, C] f32 (pre-transposed nn.Linear weights);
    b: [num_kap, 1, C] f32; key: jax PRNG key for the Gumbel noise.
    Returns [B, num_kap, C] f32 (matches torch.stack(out, dim=1))."""
    B, D = x.shape
    num_kap, _, C = w.shape
    N = num_kap * C

    # Pack all heads into one [D, num_kap*C] weight / [1, num_kap*C] bias so the
    # kernel runs a single MXU matmul and writes a lane-dense output slab.
    w_packed = jnp.transpose(w, (1, 0, 2)).reshape(D, N)
    b_packed = b.reshape(1, N)
    # Gumbel noise for every (batch, head, class) element.
    g = jax.random.gumbel(key, (B, N), dtype=jnp.float32)

    # Batch tiling: a single block at small B, (8,128)-aligned tiles at large B.
    bt = 256 if (B > 256 and B % 256 == 0) else B
    grid = (pl.cdiv(B, bt),)

    kernel = functools.partial(_kap_decision_kernel, num_kap=num_kap,
                               num_classes=C, temp=float(temp), hard=bool(hard))

    out = pl.pallas_call(
        kernel,
        out_shape=jax.ShapeDtypeStruct((B, N), x.dtype),
        grid=grid,
        in_specs=[
            pl.BlockSpec((bt, D), lambda i: (i, 0)),   # x tile
            pl.BlockSpec((D, N), lambda i: (0, 0)),    # packed weights (resident)
            pl.BlockSpec((1, N), lambda i: (0, 0)),    # packed bias (resident)
            pl.BlockSpec((bt, N), lambda i: (i, 0)),   # gumbel noise tile
        ],
        out_specs=pl.BlockSpec((bt, N), lambda i: (i, 0)),
        compiler_params=pltpu.CompilerParams(
            dimension_semantics=("parallel",)),        # batch tiles are independent
    )(x, w_packed, b_packed, g)

    # Free reshape (no transpose): [B, num_kap*C] -> [B, num_kap, C].
    return out.reshape(B, num_kap, C)


if __name__ == "__main__":
    # Small shapes consistent with the module.
    B = 2            # batch
    input_size = 32  # D
    num_classes = 8  # C
    num_kap = 4

    key = jax.random.PRNGKey(0)
    kx, kw, kb, kg = jax.random.split(key, 4)

    # Deterministic parameter init (matches nn.Linear's U(-1/sqrt(D), 1/sqrt(D)) scheme).
    bound = 1.0 / (input_size ** 0.5)
    x = jax.random.normal(kx, (B, input_size), dtype=jnp.float32)
    w = jax.random.uniform(kw, (num_kap, input_size, num_classes),
                           dtype=jnp.float32, minval=-bound, maxval=bound)
    b = jax.random.uniform(kb, (num_kap, 1, num_classes),
                           dtype=jnp.float32, minval=-bound, maxval=bound)

    out = kap_decision_forward(x, w, b, kg, temp=0.001, hard=False)
    out = jax.block_until_ready(out)

    assert out.shape == (B, num_kap, num_classes), out.shape
    # Rows of a (gumbel-)softmax must sum to 1.
    assert bool(jnp.all(jnp.abs(jnp.sum(out, axis=-1) - 1.0) < 1e-3))

    print("KERNEL_OK")
</pallas_src>

<mosaic_0001>
module attributes {stable_mosaic.version = 11 : i64} {
  func.func @_kap_decision_kernel(%arg0: i32, %arg1: memref<2x32xf32, #tpu.memory_space<vmem>>, %arg2: memref<32x32xf32, #tpu.memory_space<vmem>>, %arg3: memref<1x32xf32, #tpu.memory_space<vmem>>, %arg4: memref<2x32xf32, #tpu.memory_space<vmem>>, %arg5: memref<2x32xf32, #tpu.memory_space<vmem>>) attributes {dimension_semantics = [#tpu.dimension_semantics<parallel>], iteration_bounds = array<i64: 1>, scalar_prefetch = 0 : i64, scratch_operands = 0 : i64, tpu.core_type = #tpu.core_type<tc>, window_params = [{transform_indices = @transform_0, window_bounds = array<i64: 2, 32>}, {pipeline_mode = #tpu.pipeline_mode<synchronous>, transform_indices = @transform_1, window_bounds = array<i64: 32, 32>}, {pipeline_mode = #tpu.pipeline_mode<synchronous>, transform_indices = @transform_2, window_bounds = array<i64: 1, 32>}, {transform_indices = @transform_3, window_bounds = array<i64: 2, 32>}, {transform_indices = @transform_4, window_bounds = array<i64: 2, 32>}]} {
    %c0 = arith.constant 0 : index
    %c0_0 = arith.constant 0 : index
    %0 = vector.load %arg1[%c0, %c0_0] : memref<2x32xf32, #tpu.memory_space<vmem>>, vector<2x32xf32>
    %c0_1 = arith.constant 0 : index
    %c0_2 = arith.constant 0 : index
    %1 = vector.load %arg2[%c0_1, %c0_2] : memref<32x32xf32, #tpu.memory_space<vmem>>, vector<32x32xf32>
    %cst = arith.constant dense<0.000000e+00> : vector<2x32xf32>
    %2 = tpu.matmul %0, %1, %cst {dimension_numbers = #tpu.dot_dimension_numbers<[1], [0], [0], [1], [0, 0, 1, 1], [], []>} : vector<2x32xf32>, vector<32x32xf32>, vector<2x32xf32> -> vector<2x32xf32>
    %c0_3 = arith.constant 0 : index
    %c0_4 = arith.constant 0 : index
    %3 = vector.load %arg3[%c0_3, %c0_4] : memref<1x32xf32, #tpu.memory_space<vmem>>, vector<1x32xf32>
    %4 = vector.broadcast %3 : vector<1x32xf32> to vector<2x32xf32>
    %5 = arith.addf %2, %4 : vector<2x32xf32>
    %c0_5 = arith.constant 0 : index
    %c0_6 = arith.constant 0 : index
    %6 = vector.load %arg4[%c0_5, %c0_6] : memref<2x32xf32, #tpu.memory_space<vmem>>, vector<2x32xf32>
    %7 = arith.addf %5, %6 : vector<2x32xf32>
    %cst_7 = arith.constant 1.000000e+03 : f32
    %8 = vector.broadcast %cst_7 : f32 to vector<2x32xf32>
    %9 = arith.mulf %7, %8 : vector<2x32xf32>
    %10 = vector.extract_strided_slice %9 {offsets = [0, 0], sizes = [2, 8], strides = [1, 1]} : vector<2x32xf32> to vector<2x8xf32>
    %cst_8 = arith.constant dense<0xFF800000> : vector<2xf32>
    %11 = vector.multi_reduction <maximumf>, %10, %cst_8 [1] : vector<2x8xf32> to vector<2xf32>
    %12 = vector.shape_cast %11 : vector<2xf32> to vector<2x1xf32>
    %13 = vector.broadcast %12 : vector<2x1xf32> to vector<2x8xf32>
    %14 = arith.subf %10, %13 : vector<2x8xf32>
    %15 = math.exp %14 : vector<2x8xf32>
    %cst_9 = arith.constant dense<0.000000e+00> : vector<2xf32>
    %16 = vector.multi_reduction <add>, %15, %cst_9 [1] : vector<2x8xf32> to vector<2xf32>
    %17 = vector.shape_cast %16 : vector<2xf32> to vector<2x1xf32>
    %18 = vector.broadcast %17 : vector<2x1xf32> to vector<2x8xf32>
    %19 = arith.divf %15, %18 : vector<2x8xf32>
    %c0_10 = arith.constant 0 : index
    %c0_11 = arith.constant 0 : index
    %20 = vector.load %arg5[%c0_10, %c0_11] : memref<2x32xf32, #tpu.memory_space<vmem>>, vector<2x8xf32>
    tpu.vector_store %arg5[%c0_10, %c0_11], %19 {strides = array<i32>} : memref<2x32xf32, #tpu.memory_space<vmem>>, vector<2x8xf32>,
    %21 = vector.extract_strided_slice %9 {offsets = [0, 8], sizes = [2, 8], strides = [1, 1]} : vector<2x32xf32> to vector<2x8xf32>
    %cst_12 = arith.constant dense<0xFF800000> : vector<2xf32>
    %22 = vector.multi_reduction <maximumf>, %21, %cst_12 [1] : vector<2x8xf32> to vector<2xf32>
    %23 = vector.shape_cast %22 : vector<2xf32> to vector<2x1xf32>
    %24 = vector.broadcast %23 : vector<2x1xf32> to vector<2x8xf32>
    %25 = arith.subf %21, %24 : vector<2x8xf32>
    %26 = math.exp %25 : vector<2x8xf32>
    %cst_13 = arith.constant dense<0.000000e+00> : vector<2xf32>
    %27 = vector.multi_reduction <add>, %26, %cst_13 [1] : vector<2x8xf32> to vector<2xf32>
    %28 = vector.shape_cast %27 : vector<2xf32> to vector<2x1xf32>
    %29 = vector.broadcast %28 : vector<2x1xf32> to vector<2x8xf32>
    %30 = arith.divf %26, %29 : vector<2x8xf32>
    %c0_14 = arith.constant 0 : index
    %c8 = arith.constant 8 : index
    %31 = vector.load %arg5[%c0_14, %c8] : memref<2x32xf32, #tpu.memory_space<vmem>>, vector<2x8xf32>
    tpu.vector_store %arg5[%c0_14, %c8], %30 {strides = array<i32>} : memref<2x32xf32, #tpu.memory_space<vmem>>, vector<2x8xf32>,
    %32 = vector.extract_strided_slice %9 {offsets = [0, 16], sizes = [2, 8], strides = [1, 1]} : vector<2x32xf32> to vector<2x8xf32>
    %cst_15 = arith.constant dense<0xFF800000> : vector<2xf32>
    %33 = vector.multi_reduction <maximumf>, %32, %cst_15 [1] : vector<2x8xf32> to vector<2xf32>
    %34 = vector.shape_cast %33 : vector<2xf32> to vector<2x1xf32>
    %35 = vector.broadcast %34 : vector<2x1xf32> to vector<2x8xf32>
    %36 = arith.subf %32, %35 : vector<2x8xf32>
    %37 = math.exp %36 : vector<2x8xf32>
    %cst_16 = arith.constant dense<0.000000e+00> : vector<2xf32>
    %38 = vector.multi_reduction <add>, %37, %cst_16 [1] : vector<2x8xf32> to vector<2xf32>
    %39 = vector.shape_cast %38 : vector<2xf32> to vector<2x1xf32>
    %40 = vector.broadcast %39 : vector<2x1xf32> to vector<2x8xf32>
    %41 = arith.divf %37, %40 : vector<2x8xf32>
    %c0_17 = arith.constant 0 : index
    %c16 = arith.constant 16 : index
    %42 = vector.load %arg5[%c0_17, %c16] : memref<2x32xf32, #tpu.memory_space<vmem>>, vector<2x8xf32>
    tpu.vector_store %arg5[%c0_17, %c16], %41 {strides = array<i32>} : memref<2x32xf32, #tpu.memory_space<vmem>>, vector<2x8xf32>,
    %43 = vector.extract_strided_slice %9 {offsets = [0, 24], sizes = [2, 8], strides = [1, 1]} : vector<2x32xf32> to vector<2x8xf32>
    %cst_18 = arith.constant dense<0xFF800000> : vector<2xf32>
    %44 = vector.multi_reduction <maximumf>, %43, %cst_18 [1] : vector<2x8xf32> to vector<2xf32>
    %45 = vector.shape_cast %44 : vector<2xf32> to vector<2x1xf32>
    %46 = vector.broadcast %45 : vector<2x1xf32> to vector<2x8xf32>
    %47 = arith.subf %43, %46 : vector<2x8xf32>
    %48 = math.exp %47 : vector<2x8xf32>
    %cst_19 = arith.constant dense<0.000000e+00> : vector<2xf32>
    %49 = vector.multi_reduction <add>, %48, %cst_19 [1] : vector<2x8xf32> to vector<2xf32>
    %50 = vector.shape_cast %49 : vector<2xf32> to vector<2x1xf32>
    %51 = vector.broadcast %50 : vector<2x1xf32> to vector<2x8xf32>
    %52 = arith.divf %48, %51 : vector<2x8xf32>
    %c0_20 = arith.constant 0 : index
    %c24 = arith.constant 24 : index
    %53 = vector.load %arg5[%c0_20, %c24] : memref<2x32xf32, #tpu.memory_space<vmem>>, vector<2x8xf32>
    tpu.vector_store %arg5[%c0_20, %c24], %52 {strides = array<i32>} : memref<2x32xf32, #tpu.memory_space<vmem>>, vector<2x8xf32>,
    return
  }
  func.func @transform_0(%arg0: i32) -> (i32, i32) {
    %c0_i32 = arith.constant 0 : i32
    %c0_i32_0 = arith.constant 0 : i32
    return %arg0, %c0_i32 : i32, i32
  }
  func.func @transform_1(%arg0: i32) -> (i32, i32) {
    %c0_i32 = arith.constant 0 : i32
    %c0_i32_0 = arith.constant 0 : i32
    %c0_i32_1 = arith.constant 0 : i32
    return %c0_i32, %c0_i32_0 : i32, i32
  }
  func.func @transform_2(%arg0: i32) -> (i32, i32) {
    %c0_i32 = arith.constant 0 : i32
    %c0_i32_0 = arith.constant 0 : i32
    %c0_i32_1 = arith.constant 0 : i32
    return %c0_i32, %c0_i32_0 : i32, i32
  }
  func.func @transform_3(%arg0: i32) -> (i32, i32) {
    %c0_i32 = arith.constant 0 : i32
    %c0_i32_0 = arith.constant 0 : i32
    return %arg0, %c0_i32 : i32, i32
  }
  func.func @transform_4(%arg0: i32) -> (i32, i32) {
    %c0_i32 = arith.constant 0 : i32
    %c0_i32_0 = arith.constant 0 : i32
    return %arg0, %c0_i32 : i32, i32
  }
}

</mosaic_0001>

<llo_original>
// kernel: tpu_custom_call.1
$region0: #{tpu_custom_call.1}
  #allocation0 [shape = 'u32[]', space=smem, size = 0x4, offset = 0x4, fixed_abs, tag = 'smem constant byte address 0x4 - core index']
  #allocation1 [shape = 'u32[144,128]{1,0:T(1,128)}', space=vmem, size = 0x12000, scoped, tag = 'internal scratch']
  %s0 = inlined_call_operand.hbm [shape: f32[2,32], index: 0, kind: input, shape index: {}]
  %s1 = inlined_call_operand.hbm [shape: f32[32,32], index: 1, kind: input, shape index: {}]
  %s2 = inlined_call_operand.vmem [shape: f32[1,32], index: 2, kind: input, shape index: {}]
  %s3 = inlined_call_operand.vmem [shape: f32[2,32], index: 3, kind: input, shape index: {}]
  %s4 = inlined_call_operand.hbm [shape: f32[2,32], index: 4, kind: output, shape index: {}]
  %s5 = sld [smem:[#allocation0]]
  $region34: #{tpu_custom_call.1} parent=0
    _
  %s7 = ssub.s32 1, %s5
  %s8 = scalar_select 0, %s7, %s5
  $region1: #{tpu_custom_call.1} parent=0
    #allocation2 [shape = 'u8[1024]{0}', space=vmem, size = 0x400, scoped, tag = 'input window, operand 0, single buffered']
    #allocation3 [shape = 's32[1]{0}', space=sflag, size = 0x4, scoped, tag = 'scoped memory for tpu_custom_call.1']
    #allocation4 [shape = 's32[1]{0}', space=sflag, size = 0x4, scoped, tag = 'scoped memory for tpu_custom_call.1']
    #allocation5 [shape = 'u8[16384]{0}', space=vmem, size = 0x4000, scoped, tag = 'input window, operand 1, single buffered']
    #allocation6 [shape = 's32[1]{0}', space=sflag, size = 0x4, scoped, tag = 'scoped memory for tpu_custom_call.1']
    #allocation7 [shape = 'u8[1024]{0}', space=vmem, size = 0x400, scoped, tag = 'output window, operand 0, single buffered']
    %9 = vsyncpa [#allocation3], 0
    %10 = vsyncpa [#allocation6], 0
    %11 = vsyncpa [#allocation4], 0
    // Predicated region
    $region2: #{tpu_custom_call.1} parent=1 // pred_check
      _
    $region3: #{tpu_custom_call.1} parent=1 // pred_check_branch
      %13 = sbr.rel (0) target = $region5
    $region4: #{tpu_custom_call.1} parent=1 // pred_region
      %s15 = ssub.s32 32, 32
      %16 = vsyncadd [#allocation3], %s15
      %s18 = sshll.u32 [#allocation2], 4
      %s19 = int_to_ptr.vmem [resolvable:$true] %s18
      %21 = dma.hbm_to_vmem [thread:$0]  %s0, 32, %s19, [#allocation3]
    $region5: #{tpu_custom_call.1} parent=1 // pred_fallthru
      _
    // Predicated region
    $region6: #{tpu_custom_call.1} parent=1 // pred_check
      _
    $region7: #{tpu_custom_call.1} parent=1 // pred_check_branch
      %23 = sbr.rel (0) target = $region9
    $region8: #{tpu_custom_call.1} parent=1 // pred_region
      %s25 = ssub.s32 512, 512
      %26 = vsyncadd [#allocation6], %s25
      %s27 = sshll.u32 [#allocation5], 4
      %s28 = int_to_ptr.vmem [resolvable:$true] %s27
      %33 = dma.hbm_to_vmem [thread:$0]  %s1, 512, %s28, [#allocation6], 128, 128, 8
    $region9: #{tpu_custom_call.1} parent=1 // pred_fallthru
      _
    // Predicated region
    $region10: #{tpu_custom_call.1} parent=1 // pred_check
      _
    $region11: #{tpu_custom_call.1} parent=1 // pred_check_branch
      %35 = sbr.rel (0) target = $region13
    $region12: #{tpu_custom_call.1} parent=1 // pred_region
      _
    $region13: #{tpu_custom_call.1} parent=1 // pred_fallthru
      _
    // Predicated region
    $region14: #{tpu_custom_call.1} parent=1 // pred_check
      _
    $region15: #{tpu_custom_call.1} parent=1 // pred_check_branch
      %37 = sbr.rel (0) target = $region17
    $region16: #{tpu_custom_call.1} parent=1 // pred_region
      _
    $region17: #{tpu_custom_call.1} parent=1 // pred_fallthru
      _
    // Predicated region
    $region18: #{tpu_custom_call.1} parent=1 // pred_check
      _
    $region19: #{tpu_custom_call.1} parent=1 // pred_check_branch
      %39 = sbr.rel (0) target = $region21
    $region20: #{tpu_custom_call.1} parent=1 // pred_region
      %40 = dma.done [#allocation3], 32
    $region21: #{tpu_custom_call.1} parent=1 // pred_fallthru
      _
    // Predicated region
    $region22: #{tpu_custom_call.1} parent=1 // pred_check
      _
    $region23: #{tpu_custom_call.1} parent=1 // pred_check_branch
      %42 = sbr.rel (0) target = $region25
    $region24: #{tpu_custom_call.1} parent=1 // pred_region
      %43 = dma.done [#allocation6], 512
    $region25: #{tpu_custom_call.1} parent=1 // pred_fallthru
      _
    %v44 = vld [vmem:[#allocation2] sm:$0x3]
    %v45 = vld [vmem:[#allocation5] sm:$0xff]
    %v46 = vld [vmem:[#allocation5 + $0x8] sm:$0xff]
    %v47 = vld [vmem:[#allocation5 + $0x10] sm:$0xff]
    %v48 = vld [vmem:[#allocation5 + $0x18] sm:$0xff]
    %v49 = vld [vmem:[%s2] sm:$0x1]
    %v51 = vlaneseq
    %v52 = vshrl.u32 %v51, 7
    %v53 = vsub.s32 0, %v52
    %v54 = vrot.slane %v49, %v53
    %vm56 = vcmask 261120
    %v58 = vsel %vm56, %v44, 0
    %60 = vmatprep.subr.mxu0 0.0
    %61 = vmatpush1.msra.mxu0 %v45
    %62 = vmatprep.subr.mxu0 0.0
    %63 = vmatpush1.msra.mxu0 %v46
    %64 = vmatprep.subr.mxu0 0.0
    %65 = vmatpush1.msra.mxu0 %v47
    %66 = vmatprep.subr.mxu0 0.0
    %67 = vmatpush1.msra.mxu0 %v48
    %68 = vmatprep.subr.mxu0 0.0
    %69 = vmatpush1.msra.mxu0 0.0
    %70 = vmatprep.subr.mxu0 0.0
    %71 = vmatpush1.msra.mxu0 0.0
    %72 = vmatprep.subr.mxu0 0.0
    %73 = vmatpush1.msra.mxu0 0.0
    %74 = vmatprep.subr.mxu0 0.0
    %75 = vmatpush1.msra.mxu0 0.0
    %76 = vmatprep.subr.mxu0 0.0
    %77 = vmatpush1.msra.mxu0 0.0
    %78 = vmatprep.subr.mxu0 0.0
    %79 = vmatpush1.msra.mxu0 0.0
    %80 = vmatprep.subr.mxu0 0.0
    %81 = vmatpush1.msra.mxu0 0.0
    %82 = vmatprep.subr.mxu0 0.0
    %83 = vmatpush1.msra.mxu0 0.0
    %84 = vmatprep.subr.mxu0 0.0
    %85 = vmatpush1.msra.mxu0 0.0
    %86 = vmatprep.subr.mxu0 0.0
    %87 = vmatpush1.msra.mxu0 0.0
    %88 = vmatprep.subr.mxu0 0.0
    %89 = vmatpush1.msra.mxu0 0.0
    %90 = vmatprep.subr.mxu0 0.0
    %91 = vmatpush1.msra.mxu0 0.0
    %92 = vmatprep.subr.mxu0 0.0
    %93 = vmatpush1.msra.mxu0 0.0
    %94 = vmatprep.subr.mxu0 0.0
    %95 = vmatpush1.msra.mxu0 0.0
    %96 = vmatprep.subr.mxu0 0.0
    %97 = vmatpush1.msra.mxu0 0.0
    %98 = vmatprep.subr.mxu0 0.0
    %99 = vmatpush1.msra.mxu0 0.0
    %100 = vmatprep.subr.mxu0 0.0
    %101 = vmatpush1.msra.mxu0 0.0
    %102 = vmatprep.subr.mxu0 0.0
    %103 = vmatpush1.msra.mxu0 0.0
    %104 = vmatprep.subr.mxu0 0.0
    %105 = vmatpush1.msra.mxu0 0.0
    %106 = vmatprep.subr.mxu0 0.0
    %107 = vmatpush1.msra.mxu0 0.0
    %108 = vmatprep.subr.mxu0 0.0
    %109 = vmatpush1.msra.mxu0 0.0
    %110 = vmatprep.subr.mxu0 0.0
    %111 = vmatpush1.msra.mxu0 0.0
    %112 = vmatprep.subr.mxu0 0.0
    %113 = vmatpush1.msra.mxu0 0.0
    %114 = vmatprep.subr.mxu0 0.0
    %115 = vmatpush1.msra.mxu0 0.0
    %116 = vmatprep.subr.mxu0 0.0
    %117 = vmatpush1.msra.mxu0 0.0
    %118 = vmatprep.subr.mxu0 0.0
    %119 = vmatpush1.msra.mxu0 0.0
    %120 = vmatprep.subr.mxu0 0.0
    %121 = vmatpush1.msra.mxu0 0.0
    %122 = vmatprep.subr.mxu0 0.0
    %123 = vmatpush1.msra.mxu0 0.0
    %124 = vmatprep.mubr.f32.mxu0 0.0
    %125 = vmatmul.mubr.f32.gmra.mrb[0].mxu0 %v58
    %v126 = vpop.f32.mrb[0].mxu0
    %v127 = vadd.f32 %v54, %v126
    %v128 = vpop.f32.mrb[0].mxu0
    %129 = vdwg.mxu0
    %v130 = vld [vmem:[%s3] sm:$0x3]
    %v131 = vadd.f32 %v127, %v130
    %v132 = vmul.f32 %v131, 1000.0
    %vm133 = vcmask 58368
    %v134 = vsel %vm133, %v132, -inf
    %135 = vmax.xlane.f32.xlu0 %v134
    %v136 = vpop.xlane.xlu0 %135
    %v137 = vsub.f32 %v132, %v136
    %v138 = vmul.f32 %v137, 1.442695
    %v139 = vpow.pop %v138
    %v140 = vsel %vm133, %v139, 0.0
    %141 = vadd.xlane.f32.xlu0 %v140
    %v142 = vpop.xlane.xlu0 %141
    %v143 = vrcp.pop %v142
    %v144 = vmul.f32 %v139, %v143
    %145 = vst.msk [vmem:[#allocation7] sm:$0x3] %vm133, %v144
    %vm146 = vcmask 123968
    %v147 = vsel %vm146, %v132, -inf
    %148 = vmax.xlane.f32.xlu0 %v147
    %v149 = vpop.xlane.xlu0 %148
    %v150 = vsub.f32 %v132, %v149
    %v151 = vmul.f32 %v150, 1.442695
    %v152 = vpow.pop %v151
    %154 = vrot.lane.b32.xlu0 %v152, 120
    %v155 = vpop.permute.xlu0 %154
    %v157 = vsel %vm133, %v155, 0.0
    %158 = vadd.xlane.f32.xlu0 %v157
    %v159 = vpop.xlane.xlu0 %158
    %v160 = vrcp.pop %v159
    %v161 = vmul.f32 %v152, %v160
    %162 = vst.msk [vmem:[#allocation7] sm:$0x3] %vm146, %v161
    %vm163 = vcmask 189568
    %v164 = vsel %vm163, %v132, -inf
    %165 = vmax.xlane.f32.xlu0 %v164
    %v166 = vpop.xlane.xlu0 %165
    %v167 = vsub.f32 %v132, %v166
    %v168 = vmul.f32 %v167, 1.442695
    %v169 = vpow.pop %v168
    %171 = vrot.lane.b32.xlu0 %v169, 112
    %v172 = vpop.permute.xlu0 %171
    %v174 = vsel %vm133, %v172, 0.0
    %175 = vadd.xlane.f32.xlu0 %v174
    %v176 = vpop.xlane.xlu0 %175
    %v177 = vrcp.pop %v176
    %v178 = vmul.f32 %v169, %v177
    %179 = vst.msk [vmem:[#allocation7] sm:$0x3] %vm163, %v178
    %vm180 = vcmask 255168
    %v181 = vsel %vm180, %v132, -inf
    %182 = vmax.xlane.f32.xlu0 %v181
    %v183 = vpop.xlane.xlu0 %182
    %v184 = vsub.f32 %v132, %v183
    %v185 = vmul.f32 %v184, 1.442695
    %v186 = vpow.pop %v185
    %188 = vrot.lane.b32.xlu0 %v186, 104
    %v189 = vpop.permute.xlu0 %188
    %v191 = vsel %vm133, %v189, 0.0
    %192 = vadd.xlane.f32.xlu0 %v191
    %v193 = vpop.xlane.xlu0 %192
    %v194 = vrcp.pop %v193
    %v195 = vmul.f32 %v186, %v194
    %196 = vst.msk [vmem:[#allocation7] sm:$0x3] %vm180, %v195
    // Predicated region
    $region26: #{tpu_custom_call.1} parent=1 // pred_check
      _
    $region27: #{tpu_custom_call.1} parent=1 // pred_check_branch
      %198 = sbr.rel (0) target = $region29
    $region28: #{tpu_custom_call.1} parent=1 // pred_region
      %s200 = ssub.s32 32, 32
      %201 = vsyncadd [#allocation4], %s200
      %s203 = sshll.u32 [#allocation7], 4
      %s204 = int_to_ptr.vmem [resolvable:$true] %s203
      %206 = dma.vmem_to_hbm [thread:$0]  %s204, 32, %s4, [#allocation4]
    $region29: #{tpu_custom_call.1} parent=1 // pred_fallthru
      _
    // Predicated region
    $region30: #{tpu_custom_call.1} parent=1 // pred_check
      _
    $region31: #{tpu_custom_call.1} parent=1 // pred_check_branch
      %208 = sbr.rel (0) target = $region33
    $region32: #{tpu_custom_call.1} parent=1 // pred_region
      %209 = dma.done [#allocation4], 32
    $region33: #{tpu_custom_call.1} parent=1 // pred_fallthru
      _
    %210 = vsyncpa [#allocation3], 1
    %211 = vsyncpa [#allocation6], 1
    %212 = vsyncpa [#allocation4], 1

</llo_original>
